<compile_context>
chip_gen: v5e
topology: v5e:2x2
jax: 0.10.0
libtpu: 0.0.40
codegen_flags: <defaults>
</compile_context>

<pallas_src>
import functools

import jax
import jax.numpy as jnp
from jax.experimental import pallas as pl
from jax.experimental.pallas import tpu as pltpu


def _round_up(x, m):
    return ((x + m - 1) // m) * m


def _vmem_budget():
    """(vmem_limit_bytes, tile-derivation budget) with per-chip headroom."""
    phys = 128 * 1024 * 1024
    try:
        info = pltpu.get_tpu_info()
        phys = int(getattr(info, "vmem_capacity_bytes", phys))
    except Exception:
        pass
    # Request at most 3/4 of physical VMEM (v7x: 48 of 64 MiB; v5e/v6e: 96 of
    # 128 MiB) so compiler-internal scratch / pipelining buffers still fit.
    limit = min(phys * 3 // 4, 96 * 1024 * 1024)
    # Tile derivation leaves further headroom below the requested limit.
    budget = limit * 3 // 4
    return limit, budget


def _lora_kernel_fused(x_ref, a_ref, b_ref, o_ref, *, alpha):
    """1-D grid: B fully resident, both matmuls per row tile."""
    # (tm, in_dim) @ (in_dim, rank) -> (tm, rank), f32 accumulation on the MXU.
    xa = jnp.dot(x_ref[...], a_ref[...], preferred_element_type=jnp.float32)
    # Scale the tiny (tm, rank) intermediate, not the (tm, out_dim) output:
    # ~out_dim/rank fewer VPU ops for the same result.
    xa = xa * alpha
    # (tm, rank) @ (rank, out_dim) -> (tm, out_dim), lane-dense store.
    out = jnp.dot(xa.astype(b_ref.dtype), b_ref[...],
                  preferred_element_type=jnp.float32)
    o_ref[...] = out.astype(o_ref.dtype)


def _lora_kernel_cached(x_ref, a_ref, b_ref, o_ref, xa_ref, *, alpha):
    """2-D grid: alpha*(x@A) computed once per row tile (j==0), cached in VMEM."""
    @pl.when(pl.program_id(1) == 0)
    def _():
        xa = jnp.dot(x_ref[...], a_ref[...], preferred_element_type=jnp.float32)
        xa_ref[...] = xa * alpha
    out = jnp.dot(xa_ref[...].astype(b_ref.dtype), b_ref[...],
                  preferred_element_type=jnp.float32)
    o_ref[...] = out.astype(o_ref.dtype)


def lora_forward(x, A, B, alpha, *, tm=None, tn=None, compute_dtype=None):
    """alpha * (x @ A @ B), tiled over rows (M) and (optionally) out_dim.

    - Arbitrary leading x dims are flattened to M; ragged M is handled by a
      cdiv grid with masked partial tail tiles (no pad/slice HBM round-trips).
    - Pass compute_dtype=jnp.bfloat16 for f32 inputs on production shapes to
      halve HBM bytes (accumulation stays f32; results round like bf16 LoRA).
    """
    orig_shape = x.shape
    in_dim = orig_shape[-1]
    rank, out_dim = B.shape
    assert A.shape == (in_dim, rank), (A.shape, (in_dim, rank))

    x2 = x.reshape(-1, in_dim)
    M = x2.shape[0]
    out_dtype = x.dtype

    if compute_dtype is not None:
        x2 = x2.astype(compute_dtype)
        A = A.astype(compute_dtype)
        B = B.astype(compute_dtype)
    itemsize = jnp.dtype(x2.dtype).itemsize
    # Sublane packing alignment: f32 -> 8, bf16 -> 16, int8/fp8 -> 32.
    row_align = {4: 8, 2: 16, 1: 32}.get(itemsize, 8)

    vmem_limit, budget = _vmem_budget()

    # --- column tiling: prefer fully-resident B (1-D grid, no xa recompute) ---
    if tn is None:
        fixed_full = 2 * (in_dim * rank + rank * out_dim) * itemsize
        per_row_full = 2 * (in_dim + out_dim) * itemsize
        tm_cap_full = (budget - fixed_full) // per_row_full if budget > fixed_full else 0
        if tm_cap_full >= min(256, _round_up(M, row_align)) or out_dim % 128 != 0:
            tn = out_dim                    # 1-D grid, B resident
        else:
            tn = min(out_dim, 512)          # 2-D grid, lane-dense 128-multiple
            while out_dim % tn != 0:
                tn -= 128
    assert out_dim % tn == 0, (out_dim, tn)
    one_d = (tn == out_dim)

    # --- row tile: as large as fits the budget, aligned to dtype packing ---
    if tm is None:
        fixed = 2 * (in_dim * rank + rank * tn) * itemsize
        per_row = 2 * (in_dim + tn) * itemsize
        if not one_d:
            per_row += 4 * max(rank, 128)   # f32 xa scratch (lane-padded)
        tm_cap = (budget - fixed) // per_row if budget > fixed else row_align
        tm = min(512, int(tm_cap), _round_up(M, row_align))
        tm = max(row_align, (tm // row_align) * row_align)
        # v7x megacore: keep >=2 row tiles when possible so both TensorCores
        # get work without duplicating x traffic (row axis is "parallel").
        while pl.cdiv(M, tm) < 2 and tm >= 2 * row_align:
            tm = max(row_align, ((tm // 2) // row_align) * row_align)
    assert tm % row_align == 0, (tm, row_align)

    num_row_tiles = pl.cdiv(M, tm)

    if one_d:
        grid = (num_row_tiles,)
        kernel = functools.partial(_lora_kernel_fused, alpha=float(alpha))
        in_specs = [
            pl.BlockSpec((tm, in_dim), lambda i: (i, 0)),        # x row tile
            pl.BlockSpec((in_dim, rank), lambda i: (0, 0)),      # A resident
            pl.BlockSpec((rank, out_dim), lambda i: (0, 0)),     # B resident
        ]
        out_specs = pl.BlockSpec((tm, out_dim), lambda i: (i, 0))
        scratch_shapes = []
        dim_sem = ("parallel",)
        b_fetches = 1
    else:
        grid = (num_row_tiles, out_dim // tn)
        kernel = functools.partial(_lora_kernel_cached, alpha=float(alpha))
        in_specs = [
            pl.BlockSpec((tm, in_dim), lambda i, j: (i, 0)),     # x row tile (reused over j)
            pl.BlockSpec((in_dim, rank), lambda i, j: (0, 0)),   # A resident
            pl.BlockSpec((rank, tn), lambda i, j: (0, j)),       # B col tile
        ]
        out_specs = pl.BlockSpec((tm, tn), lambda i, j: (i, j))
        scratch_shapes = [pltpu.VMEM((tm, rank), jnp.float32)]   # cached alpha*(x@A)
        # j must stay ordered (and on the same core as its i) for scratch reuse.
        dim_sem = ("parallel", "arbitrary")
        b_fetches = num_row_tiles

    # Honest schedule cost: xa computed once per row, B re-fetched per row tile
    # only on the 2-D path.
    flops = 2 * M * rank * (in_dim + out_dim)
    bytes_accessed = (M * in_dim + in_dim * rank
                      + b_fetches * rank * out_dim + M * out_dim) * itemsize

    out = pl.pallas_call(
        kernel,
        out_shape=jax.ShapeDtypeStruct((M, out_dim), out_dtype),
        grid_spec=pltpu.PrefetchScalarGridSpec(
            num_scalar_prefetch=0,
            grid=grid,
            in_specs=in_specs,
            out_specs=out_specs,
            scratch_shapes=scratch_shapes,
        ),
        compiler_params=pltpu.CompilerParams(
            dimension_semantics=dim_sem,
            vmem_limit_bytes=vmem_limit,
        ),
        cost_estimate=pl.CostEstimate(
            flops=flops, transcendentals=0, bytes_accessed=bytes_accessed),
    )(x2, A, B)

    return out.reshape(*orig_shape[:-1], out_dim)
    # TODO(synk): when this LoRA branch is added to a base projection, fuse the
    # add via input_output_aliases (accumulate into the base tile in-kernel) to
    # remove the extra HBM read+write of the (M, out_dim) output.


if __name__ == "__main__":
    # Small shapes consistent with the module: batch=2, seq=8, hidden(in_dim)=32,
    # rank=4, out_dim=32, alpha=2.0.
    batch, seq, in_dim, rank, out_dim = 2, 8, 32, 4, 32
    alpha = 2.0

    key = jax.random.PRNGKey(0)
    kx, ka, kb = jax.random.split(key, 3)

    x = jax.random.normal(kx, (batch, seq, in_dim), dtype=jnp.float32)

    # Parameter init mirroring the module's __init__:
    #   A ~ randn(in_dim, rank) / sqrt(rank),  B = zeros(rank, out_dim)
    std_dev = 1.0 / jnp.sqrt(jnp.float32(rank))
    A = jax.random.normal(ka, (in_dim, rank), dtype=jnp.float32) * std_dev
    B_init = jnp.zeros((rank, out_dim), dtype=jnp.float32)

    # 1) Module's initial (zero) B.
    out0 = jax.block_until_ready(lora_forward(x, A, B_init, alpha))
    assert out0.shape == (batch, seq, out_dim)
    assert jnp.allclose(out0, jnp.zeros_like(out0), atol=1e-6)

    # 2) Trained-B path, exact f32 numerics.
    B = jax.random.normal(kb, (rank, out_dim), dtype=jnp.float32) * 0.1
    out = jax.block_until_ready(lora_forward(x, A, B, alpha))
    ref = alpha * (x @ A @ B)
    assert out.shape == ref.shape
    assert jnp.allclose(out, ref, atol=1e-5, rtol=1e-5)

    # 3) Ragged M (M=5): cdiv grid with masked tail tile, no pad/slice copies.
    x_ragged = jax.random.normal(kx, (1, 5, in_dim), dtype=jnp.float32)
    out_r = jax.block_until_ready(lora_forward(x_ragged, A, B, alpha))
    ref_r = alpha * (x_ragged @ A @ B)
    assert jnp.allclose(out_r, ref_r, atol=1e-5, rtol=1e-5)

    # 4) Recommended bf16 compute path (f32 accumulation), looser tolerance.
    out_bf = jax.block_until_ready(
        lora_forward(x, A, B, alpha, compute_dtype=jnp.bfloat16))
    assert out_bf.dtype == x.dtype
    assert jnp.allclose(out_bf, ref, atol=5e-2, rtol=5e-2)

    # 5) Force the 2-D cached-xa path (column-tiled B) with a ragged row tile.
    in2, r2, od2, M2 = 128, 8, 256, 24
    k1, k2, k3 = jax.random.split(jax.random.PRNGKey(1), 3)
    x_big = jax.random.normal(k1, (M2, in2), dtype=jnp.float32)
    A2 = jax.random.normal(k2, (in2, r2), dtype=jnp.float32) / jnp.sqrt(jnp.float32(r2))
    B2 = jax.random.normal(k3, (r2, od2), dtype=jnp.float32) * 0.1
    out2 = jax.block_until_ready(lora_forward(x_big, A2, B2, alpha, tm=16, tn=128))
    ref2 = alpha * (x_big @ A2 @ B2)
    assert jnp.allclose(out2, ref2, atol=1e-4, rtol=1e-4)

    print("KERNEL_OK")
</pallas_src>

<mosaic_0001>
module attributes {stable_mosaic.version = 11 : i64} {
  func.func @_lora_kernel_fused(%arg0: i32, %arg1: memref<8x32xf32, #tpu.memory_space<vmem>>, %arg2: memref<32x4xf32, #tpu.memory_space<vmem>>, %arg3: memref<4x32xf32, #tpu.memory_space<vmem>>, %arg4: memref<8x32xf32, #tpu.memory_space<vmem>>) attributes {dimension_semantics = [#tpu.dimension_semantics<parallel>], iteration_bounds = array<i64: 2>, scalar_prefetch = 0 : i64, scratch_operands = 0 : i64, tpu.core_type = #tpu.core_type<tc>, window_params = [{transform_indices = @transform_0, window_bounds = array<i64: 8, 32>}, {pipeline_mode = #tpu.pipeline_mode<synchronous>, transform_indices = @transform_1, window_bounds = array<i64: 32, 4>}, {pipeline_mode = #tpu.pipeline_mode<synchronous>, transform_indices = @transform_2, window_bounds = array<i64: 4, 32>}, {transform_indices = @transform_3, window_bounds = array<i64: 8, 32>}]} {
    %c0 = arith.constant 0 : index
    %c0_0 = arith.constant 0 : index
    %0 = vector.load %arg1[%c0, %c0_0] : memref<8x32xf32, #tpu.memory_space<vmem>>, vector<8x32xf32>
    %c0_1 = arith.constant 0 : index
    %c0_2 = arith.constant 0 : index
    %1 = vector.load %arg2[%c0_1, %c0_2] : memref<32x4xf32, #tpu.memory_space<vmem>>, vector<32x4xf32>
    %cst = arith.constant dense<0.000000e+00> : vector<8x4xf32>
    %2 = tpu.matmul %0, %1, %cst {dimension_numbers = #tpu.dot_dimension_numbers<[1], [0], [0], [1], [0, 0, 1, 1], [], []>} : vector<8x32xf32>, vector<32x4xf32>, vector<8x4xf32> -> vector<8x4xf32>
    %cst_3 = arith.constant 2.000000e+00 : f32
    %3 = vector.broadcast %cst_3 : f32 to vector<8x4xf32>
    %4 = arith.mulf %2, %3 : vector<8x4xf32>
    %c0_4 = arith.constant 0 : index
    %c0_5 = arith.constant 0 : index
    %5 = vector.load %arg3[%c0_4, %c0_5] : memref<4x32xf32, #tpu.memory_space<vmem>>, vector<4x32xf32>
    %cst_6 = arith.constant dense<0.000000e+00> : vector<8x32xf32>
    %6 = tpu.matmul %4, %5, %cst_6 {dimension_numbers = #tpu.dot_dimension_numbers<[1], [0], [0], [1], [0, 0, 1, 1], [], []>} : vector<8x4xf32>, vector<4x32xf32>, vector<8x32xf32> -> vector<8x32xf32>
    %c0_7 = arith.constant 0 : index
    %c0_8 = arith.constant 0 : index
    %7 = vector.load %arg4[%c0_7, %c0_8] : memref<8x32xf32, #tpu.memory_space<vmem>>, vector<8x32xf32>
    tpu.vector_store %arg4[%c0_7, %c0_8], %6 {strides = array<i32>} : memref<8x32xf32, #tpu.memory_space<vmem>>, vector<8x32xf32>,
    return
  }
  func.func @transform_0(%arg0: i32) -> (i32, i32) {
    %c0_i32 = arith.constant 0 : i32
    %c0_i32_0 = arith.constant 0 : i32
    return %arg0, %c0_i32 : i32, i32
  }
  func.func @transform_1(%arg0: i32) -> (i32, i32) {
    %c0_i32 = arith.constant 0 : i32
    %c0_i32_0 = arith.constant 0 : i32
    %c0_i32_1 = arith.constant 0 : i32
    return %c0_i32, %c0_i32_0 : i32, i32
  }
  func.func @transform_2(%arg0: i32) -> (i32, i32) {
    %c0_i32 = arith.constant 0 : i32
    %c0_i32_0 = arith.constant 0 : i32
    %c0_i32_1 = arith.constant 0 : i32
    return %c0_i32, %c0_i32_0 : i32, i32
  }
  func.func @transform_3(%arg0: i32) -> (i32, i32) {
    %c0_i32 = arith.constant 0 : i32
    %c0_i32_0 = arith.constant 0 : i32
    return %arg0, %c0_i32 : i32, i32
  }
}

</mosaic_0001>

<llo_original>
// kernel: tpu_custom_call.1
$region0: #{tpu_custom_call.1}
  #allocation0 [shape = 'u32[]', space=smem, size = 0x4, offset = 0x4, fixed_abs, tag = 'smem constant byte address 0x4 - core index']
  #allocation1 [shape = 'u32[72,128]{1,0:T(1,128)}', space=vmem, size = 0x9000, scoped, tag = 'internal scratch']
  %s0 = inlined_call_operand.vmem [shape: f32[16,32], index: 0, kind: input, shape index: {}]
  %s1 = inlined_call_operand.vmem [shape: f32[32,4], index: 1, kind: input, shape index: {}]
  %s2 = inlined_call_operand.vmem [shape: f32[4,32], index: 2, kind: input, shape index: {}]
  %s3 = inlined_call_operand.hbm [shape: f32[16,32], index: 3, kind: output, shape index: {}]
  %s4 = sld [smem:[#allocation0]]
  $region45: #{tpu_custom_call.1} parent=0
    _
  %s6 = ssub.s32 1, %s4
  %s7 = scalar_select 0, %s6, %s4
  $region1: #{tpu_custom_call.1} parent=0
    #allocation2 [shape = 'u8[8192]{0}', space=vmem, size = 0x2000, scoped, tag = 'output window, operand 0']
    #allocation3 [shape = 's32[2]{0}', space=sflag, size = 0x8, scoped, tag = 'scoped memory for tpu_custom_call.1']
    %8 = vsyncpa [#allocation3], 0
    %s9 = scalar_lea.sflag [#allocation3], 1
    %10 = vsyncpa %s9, 0
    loop: start=0, step=1, limit=4
    $region2: #{tpu_custom_call.1} parent=1 // loop_pre_header
      _
    $region3: #{tpu_custom_call.1} parent=1 // loop_header
      %s12 = sphi 0, %s16
      %p13 = scmp.ge.s32.totalorder %s12, 4
      %s22 = sphi 0, %s24
      %s25 = sphi 0, %s22
      %s26 = sphi 0, %s25
      %s42 = sphi 0, %s26
      %s46 = sphi 0, %s46
      %s48 = sphi 0, %s46
      %s49 = sphi 0, %s48
      %s63 = sphi 0, %s49
      %s67 = sphi 0, %s67
      %s69 = sphi 0, %s67
      %s70 = sphi 0, %s69
      %s84 = sphi 0, %s70
      %s90 = sphi 0, %s92
      %s93 = sphi 0, %s90
      %s94 = sphi 0, %s93
      %s110 = sphi 0, %s94
    $region4: #{tpu_custom_call.1} parent=1 // loop_header_branch
      %15 = sbr.rel (%p13) target = $region8
    $region5: #{tpu_custom_call.1} parent=1 // loop_body
      %s17 = ssub.s32 %s12, 1
      %s18 = ssub.s32 %s12, 2
      %s19 = sadd.s32 %s12, 1
      %s20 = ssub.s32 %s12, %s19
      %p21 = scmp.eq.s32.totalorder %s20, 0
      %s23 = sadd.s32 %s22, 1
      %s24 = scalar_select %p21, %s22, %s23
      %p27 = pneg %p21
      %p28 = scmp.eq.s32.totalorder %s12, 1
      %p29 = por %p27, %p28
      %p30 = scmp.ne.s32.totalorder %s22, %s25
      %p31 = scmp.eq.s32.totalorder %s12, 0
      %p32 = por %p30, %p31
      %p33 = scmp.ne.s32.totalorder %s22, %s25
      %p34 = scmp.eq.s32.totalorder %s17, 1
      %p35 = por %p33, %p34
      %p36 = scmp.ne.s32.totalorder %s25, %s26
      %p37 = scmp.eq.s32.totalorder %s17, 0
      %p38 = por %p36, %p37
      %p39 = scmp.ne.s32.totalorder %s25, %s26
      %p40 = scmp.eq.s32.totalorder %s18, 1
      %p41 = por %p39, %p40
      %p43 = scmp.ne.s32.totalorder %s26, %s42
      %p44 = scmp.eq.s32.totalorder %s18, 0
      %p45 = por %p43, %p44
      %s47 = sadd.s32 %s46, 1
      %p50 = scmp.eq.s32.totalorder %s12, 1
      %p51 = scmp.ne.s32.totalorder %s46, %s48
      %p52 = scmp.eq.s32.totalorder %s12, 0
      %p53 = por %p51, %p52
      %p54 = scmp.ne.s32.totalorder %s46, %s48
      %p55 = scmp.eq.s32.totalorder %s17, 1
      %p56 = por %p54, %p55
      %p57 = scmp.ne.s32.totalorder %s48, %s49
      %p58 = scmp.eq.s32.totalorder %s17, 0
      %p59 = por %p57, %p58
      %p60 = scmp.ne.s32.totalorder %s48, %s49
      %p61 = scmp.eq.s32.totalorder %s18, 1
      %p62 = por %p60, %p61
      %p64 = scmp.ne.s32.totalorder %s49, %s63
      %p65 = scmp.eq.s32.totalorder %s18, 0
      %p66 = por %p64, %p65
      %s68 = sadd.s32 %s67, 1
      %p71 = scmp.eq.s32.totalorder %s12, 1
      %p72 = scmp.ne.s32.totalorder %s67, %s69
      %p73 = scmp.eq.s32.totalorder %s12, 0
      %p74 = por %p72, %p73
      %p75 = scmp.ne.s32.totalorder %s67, %s69
      %p76 = scmp.eq.s32.totalorder %s17, 1
      %p77 = por %p75, %p76
      %p78 = scmp.ne.s32.totalorder %s69, %s70
      %p79 = scmp.eq.s32.totalorder %s17, 0
      %p80 = por %p78, %p79
      %p81 = scmp.ne.s32.totalorder %s69, %s70
      %p82 = scmp.eq.s32.totalorder %s18, 1
      %p83 = por %p81, %p82
      %p85 = scmp.ne.s32.totalorder %s70, %s84
      %p86 = scmp.eq.s32.totalorder %s18, 0
      %p87 = por %p85, %p86
      %s88 = ssub.s32 %s12, %s19
      %p89 = scmp.eq.s32.totalorder %s88, 0
      %s91 = sadd.s32 %s90, 1
      %s92 = scalar_select %p89, %s90, %s91
      %p95 = pneg %p89
      %p96 = scmp.eq.s32.totalorder %s12, 1
      %p97 = por %p95, %p96
      %p98 = scmp.ne.s32.totalorder %s90, %s93
      %p99 = scmp.eq.s32.totalorder %s12, 0
      %p100 = por %p98, %p99
      %p101 = scmp.ne.s32.totalorder %s90, %s93
      %p102 = scmp.eq.s32.totalorder %s17, 1
      %p103 = por %p101, %p102
      %p104 = scmp.ne.s32.totalorder %s93, %s94
      %p105 = scmp.eq.s32.totalorder %s17, 0
      %p106 = por %p104, %p105
      %p107 = scmp.ne.s32.totalorder %s93, %s94
      %p108 = scmp.eq.s32.totalorder %s18, 1
      %p109 = por %p107, %p108
      %p111 = scmp.ne.s32.totalorder %s94, %s110
      %p112 = scmp.eq.s32.totalorder %s18, 0
      %p113 = por %p111, %p112
      %p114 = scmp.le.s32.totalorder 1, %s12
      %p115 = scmp.lt.s32.totalorder %s12, 3
      %p116 = pnand %p114, %p115
      %p117 = pneg %p116
      // Predicated region
      $region9: #{tpu_custom_call.1} parent=5 // pred_check
        _
      $region10: #{tpu_custom_call.1} parent=5 // pred_check_branch
        %119 = sbr.rel (%p116) target = $region12
      $region11: #{tpu_custom_call.1} parent=5 // pred_region
        %s120 = ssub.s32 %s12, 1
        // Predicated region
        $region13: #{tpu_custom_call.1} parent=11 // pred_check
          %p121 = pneg %p59
        $region14: #{tpu_custom_call.1} parent=11 // pred_check_branch
          %123 = sbr.rel (%p121) target = $region16
        $region15: #{tpu_custom_call.1} parent=11 // pred_region
          _
        $region16: #{tpu_custom_call.1} parent=11 // pred_fallthru
          _
        // Predicated region
        $region17: #{tpu_custom_call.1} parent=11 // pred_check
          %p124 = pneg %p80
        $region18: #{tpu_custom_call.1} parent=11 // pred_check_branch
          %126 = sbr.rel (%p124) target = $region20
        $region19: #{tpu_custom_call.1} parent=11 // pred_region
          _
        $region20: #{tpu_custom_call.1} parent=11 // pred_fallthru
          _
      $region12: #{tpu_custom_call.1} parent=5 // pred_fallthru
        _
      %p127 = scmp.lt.s32.totalorder %s12, 2
      // Predicated region
      $region21: #{tpu_custom_call.1} parent=5 // pred_check
        %p128 = pneg %p127
      $region22: #{tpu_custom_call.1} parent=5 // pred_check_branch
        %130 = sbr.rel (%p128) target = $region24
      $region23: #{tpu_custom_call.1} parent=5 // pred_region
        // Predicated region
        $region25: #{tpu_custom_call.1} parent=23 // pred_check
          %p131 = pneg %p32
        $region26: #{tpu_custom_call.1} parent=23 // pred_check_branch
          %133 = sbr.rel (%p131) target = $region28
        $region27: #{tpu_custom_call.1} parent=23 // pred_region
          %p134 = scmp.lt.s32.totalorder %s12, 1
          %s135 = scalar_select %p134, %s12, 1
          %s136 = smul.addr %s135, 8
          %s137 = scalar_lea.vmem %s0, %s136
        $region28: #{tpu_custom_call.1} parent=23 // pred_fallthru
          _
      $region24: #{tpu_custom_call.1} parent=5 // pred_fallthru
        _
      %p138 = scmp.le.s32.totalorder 1, %s12
      %p139 = scmp.lt.s32.totalorder %s12, 3
      %p140 = pnand %p138, %p139
      %p141 = pneg %p140
      // Predicated region
      $region29: #{tpu_custom_call.1} parent=5 // pred_check
        _
      $region30: #{tpu_custom_call.1} parent=5 // pred_check_branch
        %143 = sbr.rel (%p140) target = $region32
      $region31: #{tpu_custom_call.1} parent=5 // pred_region
        %s144 = ssub.s32 %s12, 1
        %p145 = scmp.lt.s32.totalorder %s17, 1
        %s146 = scalar_select %p145, %s17, 1
        %s147 = smul.addr %s146, 8
        %s148 = scalar_lea.vmem %s0, %s147
        %p149 = pneg %p38
        %p150 = pneg %p35
        %p151 = pneg %p59
        %p152 = pneg %p56
        %p153 = pneg %p80
        %p154 = pneg %p77
        %p155 = pneg %p106
        %p156 = pneg %p103
        %s157 = sand.u32 %s93, 1
        %s158 = scalar_lea.sflag [#allocation3], %s157
        %s159 = sand.u32 %s93, 1
        %s160 = smul.addr %s159, 8
        %s161 = scalar_lea.vmem [#allocation2], %s160
        %p162 = scmp.lt.s32.totalorder %s17, 1
        %s163 = scalar_select %p162, %s17, 1
        %s164 = smul.addr %s163, 8
        %s165 = scalar_lea.vmem %s0, %s164
        %v166 = vld [vmem:[%s165] sm:$0xff]
        %v167 = vld [vmem:[%s1] sm:$0xff]
        %v168 = vld [vmem:[%s1 + $0x8] sm:$0xff]
        %v169 = vld [vmem:[%s1 + $0x10] sm:$0xff]
        %v170 = vld [vmem:[%s1 + $0x18] sm:$0xff]
        %vm171 = vcmask 261120
        %v173 = vsel %vm171, %v166, 0
        %175 = vmatpush.msra.mxu0 0.0
        %176 = vmatpush.msra.mxu0 0.0
        %177 = vmatpush.msra.mxu0 0.0
        %178 = vmatpush.msra.mxu0 0.0
        %179 = vmatpush.msra.mxu0 0.0
        %180 = vmatpush.msra.mxu0 0.0
        %181 = vmatpush.msra.mxu0 0.0
        %182 = vmatpush.msra.mxu0 0.0
        %183 = vmatpush.msra.mxu0 0.0
        %184 = vmatpush.msra.mxu0 0.0
        %185 = vmatpush.msra.mxu0 0.0
        %186 = vmatpush.msra.mxu0 0.0
        %187 = vmatpush.msra.mxu0 %v170
        %188 = vmatpush.msra.mxu0 %v169
        %189 = vmatpush.msra.mxu0 %v168
        %190 = vmatpush.msra.mxu0 %v167
        %191 = vmatmul.f32.gmra.mxu0 %v173
        %v192 = vpop.f32.mrf.mxu0
        %v193 = vadd.f32 0.0, %v192
        %194 = vdwg.mxu0
        %v195 = vmul.f32 %v193, 2.0
        %v196 = vld [vmem:[%s2] sm:$0xf]
        %vm197 = vcmask 31744
        %v199 = vsel %vm197, %v195, 0
        %vm201 = vcmask 1043456
        %v203 = vsel %vm201, %v196, 0
        %205 = vmatpush.msra.mxu0 0.0
        %206 = vmatpush.msra.mxu0 0.0
        %207 = vmatpush.msra.mxu0 0.0
        %208 = vmatpush.msra.mxu0 0.0
        %209 = vmatpush.msra.mxu0 0.0
        %210 = vmatpush.msra.mxu0 0.0
        %211 = vmatpush.msra.mxu0 0.0
        %212 = vmatpush.msra.mxu0 0.0
        %213 = vmatpush.msra.mxu0 0.0
        %214 = vmatpush.msra.mxu0 0.0
        %215 = vmatpush.msra.mxu0 0.0
        %216 = vmatpush.msra.mxu0 0.0
        %217 = vmatpush.msra.mxu0 0.0
        %218 = vmatpush.msra.mxu0 0.0
        %219 = vmatpush.msra.mxu0 0.0
        %220 = vmatpush.msra.mxu0 %v203
        %221 = vmatmul.f32.gmra.mxu0 %v199
        %v222 = vpop.f32.mrf.mxu0
        %v223 = vadd.f32 0.0, %v222
        %224 = vdwg.mxu0
        %225 = vst.msk [vmem:[%s161] sm:$0xff] %vm171, %v223
        %s226 = sand.u32 %s93, 1
        %s227 = scalar_lea.sflag [#allocation3], %s226
        %s228 = sand.u32 %s93, 1
        %s229 = smul.addr %s228, 8
        %s230 = scalar_lea.vmem [#allocation2], %s229
        // Predicated region
        $region33: #{tpu_custom_call.1} parent=31 // pred_check
          %p231 = pneg %p103
        $region34: #{tpu_custom_call.1} parent=31 // pred_check_branch
          %233 = sbr.rel (%p231) target = $region36
        $region35: #{tpu_custom_call.1} parent=31 // pred_region
          %235 = vsyncadd %s227, 0
          %s236 = smul.addr %s17, 8
          %s237 = scalar_lea.hbm %s3, %s236
          %s239 = sshll.u32 %s230, 4
          %s240 = int_to_ptr.vmem [resolvable:$true] %s239
          %s241 = sshll.u32 %s237, 4
          %s242 = int_to_ptr.hbm [resolvable:$true] %s241
          %244 = dma.vmem_to_hbm [thread:$0]  %s240, 128, %s242, %s227
        $region36: #{tpu_custom_call.1} parent=31 // pred_fallthru
          _
      $region32: #{tpu_custom_call.1} parent=5 // pred_fallthru
        _
      %p245 = scmp.le.s32.totalorder 2, %s12
      // Predicated region
      $region37: #{tpu_custom_call.1} parent=5 // pred_check
        %p246 = pneg %p245
      $region38: #{tpu_custom_call.1} parent=5 // pred_check_branch
        %248 = sbr.rel (%p246) target = $region40
      $region39: #{tpu_custom_call.1} parent=5 // pred_region
        %s249 = ssub.s32 %s12, 2
        // Predicated region
        $region41: #{tpu_custom_call.1} parent=39 // pred_check
          %p250 = pneg %p109
        $region42: #{tpu_custom_call.1} parent=39 // pred_check_branch
          %252 = sbr.rel (%p250) target = $region44
        $region43: #{tpu_custom_call.1} parent=39 // pred_region
          %s253 = sand.u32 %s94, 1
          %s254 = scalar_lea.sflag [#allocation3], %s253
          %s255 = sand.u32 %s94, 1
          %s256 = smul.addr %s255, 8
          %s257 = scalar_lea.vmem [#allocation2], %s256
          %259 = dma.done %s254, 128
        $region44: #{tpu_custom_call.1} parent=39 // pred_fallthru
          _
      $region40: #{tpu_custom_call.1} parent=5 // pred_fallthru
        _
    $region6: #{tpu_custom_call.1} parent=1 // loop_footer
      %s16 = sadd.s32 1, %s12
    $region7: #{tpu_custom_call.1} parent=1 // loop_footer_branch
      %11 = sbr.rel target = $region3
    $region8: #{tpu_custom_call.1} parent=1 // loop_exit
      _
    %260 = vsyncpa [#allocation3], 1
    %s261 = scalar_lea.sflag [#allocation3], 1
    %262 = vsyncpa %s261, 1

</llo_original>
